<compile_context>
chip_gen: v6e
topology: v6e:2x2x1
jax: 0.10.0
libtpu: 0.0.40
codegen_flags: <defaults>
</compile_context>

<pallas_src>
import functools

import jax
import jax.numpy as jnp
from jax import lax
from jax.experimental import pallas as pl
from jax.experimental.pallas import tpu as pltpu

_ANGLE_EPS = 1e-8   # eps of stable_angle
_LN_EPS = 1e-5      # PyTorch LayerNorm default eps
_LANE = 128
_SUBLANE = 8


def _round_up(n, m):
    return (n + m - 1) // m * m


def _choose_tm(b_padded):
    """Largest power-of-two batch tile (<=512) dividing b_padded; keep >=2 grid
    steps when possible so the two v7x TensorCores both get tiles."""
    tm = _SUBLANE
    for cand in (512, 256, 128, 64, 32, 16, 8):
        if b_padded % cand == 0:
            tm = cand
            break
    if b_padded // tm < 2 and tm >= 16:
        tm //= 2
    return tm


def _complex_lin_kernel(x_ref, w_ref, p_ref, o_ref, *, activation, inv_cout,
                        mxu_dtype):
    x2 = x_ref[...]                      # (2, tm, Cin_p): [real; imag]
    tm = x2.shape[1]
    cin = x2.shape[2]
    xr = x2[0]
    xi = x2[1]

    p = p_ref[...]                       # (8, Cout_p) packed parameters
    mb = p[0:1]                          # magnitude bias
    cpb = p[1:2]                         # cos(phase_bias)
    spb = p[2:3]                         # sin(phase_bias)
    g = p[3:4]                           # LayerNorm gamma
    b = p[4:5]                           # LayerNorm beta
    mask = p[5:6]                        # 1.0 on real channels, 0.0 on padding

    # --- ComplexLinear: one fused MXU matmul for Re(psi), Im(psi), fc(|x|) ---
    xabs = jnp.sqrt(xr * xr + xi * xi)
    lhs = jnp.concatenate([x2.reshape(2 * tm, cin), xabs], axis=0)  # (3tm,Cin)
    r = jnp.dot(lhs.astype(mxu_dtype), w_ref[...],
                preferred_element_type=jnp.float32)                 # (3tm,Cout)
    pr = r[0:tm]                         # Re(psi)
    pi = r[tm:2 * tm]                    # Im(psi)
    chi = r[2 * tm:3 * tm] + mb          # fc(|x|) + magnitude_bias
    m_psi = jnp.sqrt(pr * pr + pi * pi) + mb
    m = 0.5 * m_psi + 0.5 * chi

    # stable_angle adjustment: |imag| < eps -> eps (angle path only)
    pi_adj = jnp.where(jnp.abs(pi) < _ANGLE_EPS, _ANGLE_EPS, pi)
    inv_norm = lax.rsqrt(pr * pr + pi_adj * pi_adj)

    # --- ComplexLayerNorm on magnitude (masked so padded lanes don't count) ---
    # padded lanes of m are exactly 0 (zero weight cols / zero magnitude bias),
    # so a plain sum with the true 1/Cout gives the correct mean.
    mean = jnp.sum(m, axis=-1, keepdims=True) * inv_cout
    c = (m - mean) * mask
    var = jnp.sum(c * c, axis=-1, keepdims=True) * inv_cout
    m = c * lax.rsqrt(var + _LN_EPS) * g + b

    # --- optional activation on magnitude only (compile-time static) ---
    if activation == "relu":
        m = jnp.maximum(m, 0.0)
    elif activation == "sigmoid":
        m = pl.reciprocal(1.0 + jnp.exp(-m), approx=True)   # EUP exp + recip

    # --- ComplexCollapse: m * exp(1j * (stable_angle(psi) + phase_bias)) ---
    cos_phi = (pr * cpb - pi_adj * spb) * inv_norm
    sin_phi = (pi_adj * cpb + pr * spb) * inv_norm
    o_ref[...] = jnp.stack([m * cos_phi, m * sin_phi], axis=0)


def complex_lin(x, weight, magnitude_bias, phase_bias, ln_weight, ln_bias,
                activation=None, *, tm=None, mxu_dtype=jnp.float32,
                vmem_limit_bytes=None):
    """ComplexLin forward.

    x: (B, Cin) complex64, weight: (Cin, Cout) float32 (transposed PyTorch layout).
    mxu_dtype=jnp.bfloat16 enables the faster bf16 MXU path on v6e/v7x.
    """
    B, Cin = x.shape
    Cin_w, Cout = weight.shape
    assert Cin_w == Cin

    cin_p = _round_up(Cin, _LANE)        # lane-dense matmul / load dims
    cout_p = _round_up(Cout, _LANE)      # lane-dense (unmasked) output stores
    b_p = _round_up(B, _SUBLANE)
    if tm is None:
        tm = _choose_tm(b_p)
    b_p = _round_up(b_p, tm)

    # Single stacked real/imag activation stream (one DMA path in and out).
    x2 = jnp.stack([jnp.real(x), jnp.imag(x)], axis=0).astype(jnp.float32)
    x2 = jnp.pad(x2, ((0, 0), (0, b_p - B), (0, cin_p - Cin)))

    w_p = jnp.pad(weight.astype(jnp.float32),
                  ((0, cin_p - Cin), (0, cout_p - Cout))).astype(mxu_dtype)

    # All (Cout,) parameters packed into one (8, Cout_p) tile: a single DMA.
    params = jnp.zeros((8, cout_p), jnp.float32)
    params = params.at[0, :Cout].set(magnitude_bias.astype(jnp.float32))
    params = params.at[1, :Cout].set(jnp.cos(phase_bias).astype(jnp.float32))
    params = params.at[2, :Cout].set(jnp.sin(phase_bias).astype(jnp.float32))
    params = params.at[3, :Cout].set(ln_weight.astype(jnp.float32))
    params = params.at[4, :Cout].set(ln_bias.astype(jnp.float32))
    params = params.at[5, :Cout].set(1.0)     # valid-lane mask for LayerNorm

    kernel = functools.partial(_complex_lin_kernel, activation=activation,
                               inv_cout=1.0 / Cout, mxu_dtype=mxu_dtype)

    out = pl.pallas_call(
        kernel,
        out_shape=jax.ShapeDtypeStruct((2, b_p, cout_p), jnp.float32),
        grid_spec=pltpu.PrefetchScalarGridSpec(
            num_scalar_prefetch=0,
            grid=(b_p // tm,),
            in_specs=[
                pl.BlockSpec((2, tm, cin_p), lambda i: (0, i, 0)),   # re/im x
                # Grid-invariant, fully resident weight. For production-size
                # Cin/Cout on v7x (64 MiB VMEM) tile Cout with a second grid
                # axis instead of keeping the whole weight resident.
                pl.BlockSpec((cin_p, cout_p), lambda i: (0, 0)),
                pl.BlockSpec((8, cout_p), lambda i: (0, 0)),         # params
            ],
            out_specs=pl.BlockSpec((2, tm, cout_p), lambda i: (0, i, 0)),
        ),
        compiler_params=pltpu.CompilerParams(
            dimension_semantics=("parallel",),
            vmem_limit_bytes=vmem_limit_bytes),
    )(x2, w_p, params)

    return lax.complex(out[0, :B, :Cout], out[1, :B, :Cout])


def complex_lin_ref(x, weight, magnitude_bias, phase_bias, ln_weight, ln_bias,
                    activation=None):
    """Pure-JAX reference mirroring the PyTorch module exactly."""
    psi_r = jnp.real(x) @ weight
    psi_i = jnp.imag(x) @ weight
    m_psi = jnp.sqrt(psi_r ** 2 + psi_i ** 2) + magnitude_bias
    psi_i_adj = jnp.where(jnp.abs(psi_i) < _ANGLE_EPS, _ANGLE_EPS, psi_i)
    phi = jnp.arctan2(psi_i_adj, psi_r) + phase_bias
    chi = jnp.abs(x) @ weight + magnitude_bias
    m = 0.5 * m_psi + 0.5 * chi
    mean = m.mean(-1, keepdims=True)
    var = ((m - mean) ** 2).mean(-1, keepdims=True)
    m = (m - mean) / jnp.sqrt(var + _LN_EPS) * ln_weight + ln_bias
    if activation == "relu":
        m = jnp.maximum(m, 0.0)
    elif activation == "sigmoid":
        m = jax.nn.sigmoid(m)
    return (m * jnp.exp(1j * phi)).astype(jnp.complex64)


if __name__ == "__main__":
    B, Cin, Cout = 16, 32, 32
    activation = "relu"

    key = jax.random.PRNGKey(0)
    k_xr, k_xi, k_w, k_mb = jax.random.split(key, 4)

    # deterministic synthetic parameters (shapes from module __init__)
    bound = 1.0 / jnp.sqrt(jnp.float32(Cin))
    weight = jax.random.uniform(k_w, (Cin, Cout), jnp.float32, -bound, bound)
    magnitude_bias = jax.random.uniform(k_mb, (Cout,), jnp.float32, -bound, bound)
    phase_bias = jnp.zeros((Cout,), jnp.float32)   # module inits phase bias to 0
    ln_weight = jnp.ones((Cout,), jnp.float32)
    ln_bias = jnp.zeros((Cout,), jnp.float32)

    # complex input (B, Cin)
    x = lax.complex(jax.random.normal(k_xr, (B, Cin), jnp.float32),
                    jax.random.normal(k_xi, (B, Cin), jnp.float32))

    out = complex_lin(x, weight, magnitude_bias, phase_bias,
                      ln_weight, ln_bias, activation)
    out = jax.block_until_ready(out)

    ref = complex_lin_ref(x, weight, magnitude_bias, phase_bias,
                          ln_weight, ln_bias, activation)
    assert out.shape == (B, Cout) and out.dtype == jnp.complex64
    assert jnp.allclose(out, ref, atol=1e-4, rtol=1e-4)

    print("KERNEL_OK")
</pallas_src>

<mosaic_0001>
module attributes {stable_mosaic.version = 11 : i64} {
  func.func @_complex_lin_kernel(%arg0: i32, %arg1: memref<2x8x128xf32, #tpu.memory_space<vmem>>, %arg2: memref<128x128xf32, #tpu.memory_space<vmem>>, %arg3: memref<8x128xf32, #tpu.memory_space<vmem>>, %arg4: memref<2x8x128xf32, #tpu.memory_space<vmem>>) attributes {dimension_semantics = [#tpu.dimension_semantics<parallel>], iteration_bounds = array<i64: 2>, scalar_prefetch = 0 : i64, scratch_operands = 0 : i64, tpu.core_type = #tpu.core_type<tc>, window_params = [{transform_indices = @transform_0, window_bounds = array<i64: 2, 8, 128>}, {pipeline_mode = #tpu.pipeline_mode<synchronous>, transform_indices = @transform_1, window_bounds = array<i64: 128, 128>}, {pipeline_mode = #tpu.pipeline_mode<synchronous>, transform_indices = @transform_2, window_bounds = array<i64: 8, 128>}, {transform_indices = @transform_3, window_bounds = array<i64: 2, 8, 128>}]} {
    %c0 = arith.constant 0 : index
    %c0_0 = arith.constant 0 : index
    %c0_1 = arith.constant 0 : index
    %0 = vector.load %arg1[%c0, %c0_0, %c0_1] : memref<2x8x128xf32, #tpu.memory_space<vmem>>, vector<2x8x128xf32>
    %1 = vector.extract_strided_slice %0 {offsets = [0, 0, 0], sizes = [1, 8, 128], strides = [1, 1, 1]} : vector<2x8x128xf32> to vector<1x8x128xf32>
    %2 = vector.shape_cast %1 : vector<1x8x128xf32> to vector<8x128xf32>
    %3 = vector.extract_strided_slice %0 {offsets = [1, 0, 0], sizes = [1, 8, 128], strides = [1, 1, 1]} : vector<2x8x128xf32> to vector<1x8x128xf32>
    %4 = vector.shape_cast %3 : vector<1x8x128xf32> to vector<8x128xf32>
    %c0_2 = arith.constant 0 : index
    %c0_3 = arith.constant 0 : index
    %5 = vector.load %arg3[%c0_2, %c0_3] : memref<8x128xf32, #tpu.memory_space<vmem>>, vector<8x128xf32>
    %6 = vector.extract_strided_slice %5 {offsets = [0, 0], sizes = [1, 128], strides = [1, 1]} : vector<8x128xf32> to vector<1x128xf32>
    %7 = vector.extract_strided_slice %5 {offsets = [1, 0], sizes = [1, 128], strides = [1, 1]} : vector<8x128xf32> to vector<1x128xf32>
    %8 = vector.extract_strided_slice %5 {offsets = [2, 0], sizes = [1, 128], strides = [1, 1]} : vector<8x128xf32> to vector<1x128xf32>
    %9 = vector.extract_strided_slice %5 {offsets = [3, 0], sizes = [1, 128], strides = [1, 1]} : vector<8x128xf32> to vector<1x128xf32>
    %10 = vector.extract_strided_slice %5 {offsets = [4, 0], sizes = [1, 128], strides = [1, 1]} : vector<8x128xf32> to vector<1x128xf32>
    %11 = vector.extract_strided_slice %5 {offsets = [5, 0], sizes = [1, 128], strides = [1, 1]} : vector<8x128xf32> to vector<1x128xf32>
    %12 = arith.mulf %2, %2 : vector<8x128xf32>
    %13 = arith.mulf %4, %4 : vector<8x128xf32>
    %14 = arith.addf %12, %13 : vector<8x128xf32>
    %15 = math.sqrt %14 : vector<8x128xf32>
    %16 = vector.shape_cast %0 : vector<2x8x128xf32> to vector<16x128xf32>
    %17 = tpu.concatenate %16, %15 in 0 : vector<16x128xf32>, vector<8x128xf32> -> vector<24x128xf32>
    %c0_4 = arith.constant 0 : index
    %c0_5 = arith.constant 0 : index
    %18 = vector.load %arg2[%c0_4, %c0_5] : memref<128x128xf32, #tpu.memory_space<vmem>>, vector<128x128xf32>
    %cst = arith.constant dense<0.000000e+00> : vector<24x128xf32>
    %19 = tpu.matmul %17, %18, %cst {dimension_numbers = #tpu.dot_dimension_numbers<[1], [0], [0], [1], [0, 0, 1, 1], [], []>} : vector<24x128xf32>, vector<128x128xf32>, vector<24x128xf32> -> vector<24x128xf32>
    %20 = vector.extract_strided_slice %19 {offsets = [0, 0], sizes = [8, 128], strides = [1, 1]} : vector<24x128xf32> to vector<8x128xf32>
    %21 = vector.extract_strided_slice %19 {offsets = [8, 0], sizes = [8, 128], strides = [1, 1]} : vector<24x128xf32> to vector<8x128xf32>
    %22 = vector.extract_strided_slice %19 {offsets = [16, 0], sizes = [8, 128], strides = [1, 1]} : vector<24x128xf32> to vector<8x128xf32>
    %23 = vector.broadcast %6 : vector<1x128xf32> to vector<8x128xf32>
    %24 = arith.addf %22, %23 : vector<8x128xf32>
    %25 = arith.mulf %20, %20 : vector<8x128xf32>
    %26 = arith.mulf %21, %21 : vector<8x128xf32>
    %27 = arith.addf %25, %26 : vector<8x128xf32>
    %28 = math.sqrt %27 : vector<8x128xf32>
    %29 = vector.broadcast %6 : vector<1x128xf32> to vector<8x128xf32>
    %30 = arith.addf %28, %29 : vector<8x128xf32>
    %cst_6 = arith.constant 5.000000e-01 : f32
    %31 = vector.broadcast %cst_6 : f32 to vector<8x128xf32>
    %32 = arith.mulf %31, %30 : vector<8x128xf32>
    %cst_7 = arith.constant 5.000000e-01 : f32
    %33 = vector.broadcast %cst_7 : f32 to vector<8x128xf32>
    %34 = arith.mulf %33, %24 : vector<8x128xf32>
    %35 = arith.addf %32, %34 : vector<8x128xf32>
    %36 = math.absf %21 : vector<8x128xf32>
    %cst_8 = arith.constant 9.99999993E-9 : f32
    %37 = vector.broadcast %cst_8 : f32 to vector<8x128xf32>
    %38 = arith.cmpf olt, %36, %37 : vector<8x128xf32>
    %cst_9 = arith.constant 9.99999993E-9 : f32
    %39 = vector.broadcast %cst_9 : f32 to vector<8x128xf32>
    %40 = arith.select %38, %39, %21 : vector<8x128xi1>, vector<8x128xf32>
    %41 = arith.mulf %20, %20 : vector<8x128xf32>
    %42 = arith.mulf %40, %40 : vector<8x128xf32>
    %43 = arith.addf %41, %42 : vector<8x128xf32>
    %44 = math.rsqrt %43 : vector<8x128xf32>
    %cst_10 = arith.constant dense<0.000000e+00> : vector<8xf32>
    %45 = vector.multi_reduction <add>, %35, %cst_10 [1] : vector<8x128xf32> to vector<8xf32>
    %46 = vector.shape_cast %45 : vector<8xf32> to vector<8x1xf32>
    %cst_11 = arith.constant 3.125000e-02 : f32
    %47 = vector.broadcast %cst_11 : f32 to vector<8x1xf32>
    %48 = arith.mulf %46, %47 : vector<8x1xf32>
    %49 = vector.broadcast %48 : vector<8x1xf32> to vector<8x128xf32>
    %50 = arith.subf %35, %49 : vector<8x128xf32>
    %51 = vector.broadcast %11 : vector<1x128xf32> to vector<8x128xf32>
    %52 = arith.mulf %50, %51 : vector<8x128xf32>
    %53 = arith.mulf %52, %52 : vector<8x128xf32>
    %cst_12 = arith.constant dense<0.000000e+00> : vector<8xf32>
    %54 = vector.multi_reduction <add>, %53, %cst_12 [1] : vector<8x128xf32> to vector<8xf32>
    %55 = vector.shape_cast %54 : vector<8xf32> to vector<8x1xf32>
    %cst_13 = arith.constant 3.125000e-02 : f32
    %56 = vector.broadcast %cst_13 : f32 to vector<8x1xf32>
    %57 = arith.mulf %55, %56 : vector<8x1xf32>
    %cst_14 = arith.constant 9.99999974E-6 : f32
    %58 = vector.broadcast %cst_14 : f32 to vector<8x1xf32>
    %59 = arith.addf %57, %58 : vector<8x1xf32>
    %60 = math.rsqrt %59 : vector<8x1xf32>
    %61 = vector.broadcast %60 : vector<8x1xf32> to vector<8x128xf32>
    %62 = arith.mulf %52, %61 : vector<8x128xf32>
    %63 = vector.broadcast %9 : vector<1x128xf32> to vector<8x128xf32>
    %64 = arith.mulf %62, %63 : vector<8x128xf32>
    %65 = vector.broadcast %10 : vector<1x128xf32> to vector<8x128xf32>
    %66 = arith.addf %64, %65 : vector<8x128xf32>
    %cst_15 = arith.constant 0.000000e+00 : f32
    %67 = vector.broadcast %cst_15 : f32 to vector<8x128xf32>
    %68 = arith.maximumf %66, %67 : vector<8x128xf32>
    %69 = vector.broadcast %7 : vector<1x128xf32> to vector<8x128xf32>
    %70 = arith.mulf %20, %69 : vector<8x128xf32>
    %71 = vector.broadcast %8 : vector<1x128xf32> to vector<8x128xf32>
    %72 = arith.mulf %40, %71 : vector<8x128xf32>
    %73 = arith.subf %70, %72 : vector<8x128xf32>
    %74 = arith.mulf %73, %44 : vector<8x128xf32>
    %75 = vector.broadcast %7 : vector<1x128xf32> to vector<8x128xf32>
    %76 = arith.mulf %40, %75 : vector<8x128xf32>
    %77 = vector.broadcast %8 : vector<1x128xf32> to vector<8x128xf32>
    %78 = arith.mulf %20, %77 : vector<8x128xf32>
    %79 = arith.addf %76, %78 : vector<8x128xf32>
    %80 = arith.mulf %79, %44 : vector<8x128xf32>
    %81 = arith.mulf %68, %74 : vector<8x128xf32>
    %82 = arith.mulf %68, %80 : vector<8x128xf32>
    %83 = vector.shape_cast %81 : vector<8x128xf32> to vector<1x8x128xf32>
    %84 = vector.shape_cast %82 : vector<8x128xf32> to vector<1x8x128xf32>
    %85 = tpu.concatenate %83, %84 in 0 : vector<1x8x128xf32>, vector<1x8x128xf32> -> vector<2x8x128xf32>
    %c0_16 = arith.constant 0 : index
    %c0_17 = arith.constant 0 : index
    %c0_18 = arith.constant 0 : index
    %86 = vector.load %arg4[%c0_16, %c0_17, %c0_18] : memref<2x8x128xf32, #tpu.memory_space<vmem>>, vector<2x8x128xf32>
    tpu.vector_store %arg4[%c0_16, %c0_17, %c0_18], %85 {strides = array<i32>} : memref<2x8x128xf32, #tpu.memory_space<vmem>>, vector<2x8x128xf32>,
    return
  }
  func.func @transform_0(%arg0: i32) -> (i32, i32, i32) {
    %c0_i32 = arith.constant 0 : i32
    %c0_i32_0 = arith.constant 0 : i32
    %c0_i32_1 = arith.constant 0 : i32
    return %c0_i32, %arg0, %c0_i32_0 : i32, i32, i32
  }
  func.func @transform_1(%arg0: i32) -> (i32, i32) {
    %c0_i32 = arith.constant 0 : i32
    %c0_i32_0 = arith.constant 0 : i32
    %c0_i32_1 = arith.constant 0 : i32
    return %c0_i32, %c0_i32_0 : i32, i32
  }
  func.func @transform_2(%arg0: i32) -> (i32, i32) {
    %c0_i32 = arith.constant 0 : i32
    %c0_i32_0 = arith.constant 0 : i32
    %c0_i32_1 = arith.constant 0 : i32
    return %c0_i32, %c0_i32_0 : i32, i32
  }
  func.func @transform_3(%arg0: i32) -> (i32, i32, i32) {
    %c0_i32 = arith.constant 0 : i32
    %c0_i32_0 = arith.constant 0 : i32
    %c0_i32_1 = arith.constant 0 : i32
    return %c0_i32, %arg0, %c0_i32_0 : i32, i32, i32
  }
}

</mosaic_0001>

<llo_original>
// kernel: tpu_custom_call.1
$region0: #{tpu_custom_call.1}
  #allocation0 [shape = 'u32[]', space=smem, size = 0x4, offset = 0x4, fixed_abs, tag = 'smem constant byte address 0x4 - core index']
  #allocation1 [shape = 'u32[144,128]{1,0:T(1,128)}', space=vmem, size = 0x12000, scoped, tag = 'internal scratch']
  %s0 = inlined_call_operand.hbm [shape: f32[2,16,128], index: 0, kind: input, shape index: {}]
  %s1 = inlined_call_operand.hbm [shape: f32[128,128], index: 1, kind: input, shape index: {}]
  %s2 = inlined_call_operand.hbm [shape: f32[8,128], index: 2, kind: input, shape index: {}]
  %s3 = inlined_call_operand.hbm [shape: f32[2,16,128], index: 3, kind: output, shape index: {}]
  %s4 = sld [smem:[#allocation0]]
  $region57: #{tpu_custom_call.1} parent=0
    _
  %s6 = ssub.s32 1, %s4
  %s7 = scalar_select 0, %s6, %s4
  $region1: #{tpu_custom_call.1} parent=0
    #allocation2 [shape = 'u8[16384]{0}', space=vmem, size = 0x4000, scoped, tag = 'input window, operand 0']
    #allocation3 [shape = 's32[2]{0}', space=sflag, size = 0x8, scoped, tag = 'scoped memory for tpu_custom_call.1']
    #allocation4 [shape = 's32[2]{0}', space=sflag, size = 0x8, scoped, tag = 'scoped memory for tpu_custom_call.1']
    #allocation5 [shape = 'u8[65536]{0}', space=vmem, size = 0x10000, scoped, tag = 'input window, operand 1, single buffered']
    #allocation6 [shape = 's32[1]{0}', space=sflag, size = 0x4, scoped, tag = 'scoped memory for tpu_custom_call.1']
    #allocation7 [shape = 'u8[4096]{0}', space=vmem, size = 0x1000, scoped, tag = 'input window, operand 2, single buffered']
    #allocation8 [shape = 'u8[16384]{0}', space=vmem, size = 0x4000, scoped, tag = 'output window, operand 0']
    %8 = vsyncpa [#allocation3], 0
    %s9 = scalar_lea.sflag [#allocation3], 1
    %10 = vsyncpa %s9, 0
    %11 = vsyncpa [#allocation6], 0
    %12 = vsyncpa [#allocation4], 0
    %s13 = scalar_lea.sflag [#allocation4], 1
    %14 = vsyncpa %s13, 0
    loop: start=0, step=1, limit=4
    $region2: #{tpu_custom_call.1} parent=1 // loop_pre_header
      _
    $region3: #{tpu_custom_call.1} parent=1 // loop_header
      %s16 = sphi 0, %s20
      %p17 = scmp.ge.s32.totalorder %s16, 4
      %s26 = sphi 0, %s28
      %s29 = sphi 0, %s26
      %s30 = sphi 0, %s29
      %s46 = sphi 0, %s30
      %s50 = sphi 0, %s50
      %s52 = sphi 0, %s50
      %s53 = sphi 0, %s52
      %s67 = sphi 0, %s53
      %s71 = sphi 0, %s71
      %s73 = sphi 0, %s71
      %s74 = sphi 0, %s73
      %s88 = sphi 0, %s74
      %s94 = sphi 0, %s96
      %s97 = sphi 0, %s94
      %s98 = sphi 0, %s97
      %s114 = sphi 0, %s98
    $region4: #{tpu_custom_call.1} parent=1 // loop_header_branch
      %19 = sbr.rel (%p17) target = $region8
    $region5: #{tpu_custom_call.1} parent=1 // loop_body
      %s21 = ssub.s32 %s16, 1
      %s22 = ssub.s32 %s16, 2
      %s23 = sadd.s32 %s16, 1
      %s24 = ssub.s32 %s16, %s23
      %p25 = scmp.eq.s32.totalorder %s24, 0
      %s27 = sadd.s32 %s26, 1
      %s28 = scalar_select %p25, %s26, %s27
      %p31 = pneg %p25
      %p32 = scmp.eq.s32.totalorder %s16, 1
      %p33 = por %p31, %p32
      %p34 = scmp.ne.s32.totalorder %s26, %s29
      %p35 = scmp.eq.s32.totalorder %s16, 0
      %p36 = por %p34, %p35
      %p37 = scmp.ne.s32.totalorder %s26, %s29
      %p38 = scmp.eq.s32.totalorder %s21, 1
      %p39 = por %p37, %p38
      %p40 = scmp.ne.s32.totalorder %s29, %s30
      %p41 = scmp.eq.s32.totalorder %s21, 0
      %p42 = por %p40, %p41
      %p43 = scmp.ne.s32.totalorder %s29, %s30
      %p44 = scmp.eq.s32.totalorder %s22, 1
      %p45 = por %p43, %p44
      %p47 = scmp.ne.s32.totalorder %s30, %s46
      %p48 = scmp.eq.s32.totalorder %s22, 0
      %p49 = por %p47, %p48
      %s51 = sadd.s32 %s50, 1
      %p54 = scmp.eq.s32.totalorder %s16, 1
      %p55 = scmp.ne.s32.totalorder %s50, %s52
      %p56 = scmp.eq.s32.totalorder %s16, 0
      %p57 = por %p55, %p56
      %p58 = scmp.ne.s32.totalorder %s50, %s52
      %p59 = scmp.eq.s32.totalorder %s21, 1
      %p60 = por %p58, %p59
      %p61 = scmp.ne.s32.totalorder %s52, %s53
      %p62 = scmp.eq.s32.totalorder %s21, 0
      %p63 = por %p61, %p62
      %p64 = scmp.ne.s32.totalorder %s52, %s53
      %p65 = scmp.eq.s32.totalorder %s22, 1
      %p66 = por %p64, %p65
      %p68 = scmp.ne.s32.totalorder %s53, %s67
      %p69 = scmp.eq.s32.totalorder %s22, 0
      %p70 = por %p68, %p69
      %s72 = sadd.s32 %s71, 1
      %p75 = scmp.eq.s32.totalorder %s16, 1
      %p76 = scmp.ne.s32.totalorder %s71, %s73
      %p77 = scmp.eq.s32.totalorder %s16, 0
      %p78 = por %p76, %p77
      %p79 = scmp.ne.s32.totalorder %s71, %s73
      %p80 = scmp.eq.s32.totalorder %s21, 1
      %p81 = por %p79, %p80
      %p82 = scmp.ne.s32.totalorder %s73, %s74
      %p83 = scmp.eq.s32.totalorder %s21, 0
      %p84 = por %p82, %p83
      %p85 = scmp.ne.s32.totalorder %s73, %s74
      %p86 = scmp.eq.s32.totalorder %s22, 1
      %p87 = por %p85, %p86
      %p89 = scmp.ne.s32.totalorder %s74, %s88
      %p90 = scmp.eq.s32.totalorder %s22, 0
      %p91 = por %p89, %p90
      %s92 = ssub.s32 %s16, %s23
      %p93 = scmp.eq.s32.totalorder %s92, 0
      %s95 = sadd.s32 %s94, 1
      %s96 = scalar_select %p93, %s94, %s95
      %p99 = pneg %p93
      %p100 = scmp.eq.s32.totalorder %s16, 1
      %p101 = por %p99, %p100
      %p102 = scmp.ne.s32.totalorder %s94, %s97
      %p103 = scmp.eq.s32.totalorder %s16, 0
      %p104 = por %p102, %p103
      %p105 = scmp.ne.s32.totalorder %s94, %s97
      %p106 = scmp.eq.s32.totalorder %s21, 1
      %p107 = por %p105, %p106
      %p108 = scmp.ne.s32.totalorder %s97, %s98
      %p109 = scmp.eq.s32.totalorder %s21, 0
      %p110 = por %p108, %p109
      %p111 = scmp.ne.s32.totalorder %s97, %s98
      %p112 = scmp.eq.s32.totalorder %s22, 1
      %p113 = por %p111, %p112
      %p115 = scmp.ne.s32.totalorder %s98, %s114
      %p116 = scmp.eq.s32.totalorder %s22, 0
      %p117 = por %p115, %p116
      %p118 = scmp.le.s32.totalorder 1, %s16
      %p119 = scmp.lt.s32.totalorder %s16, 3
      %p120 = pnand %p118, %p119
      %p121 = pneg %p120
      // Predicated region
      $region9: #{tpu_custom_call.1} parent=5 // pred_check
        _
      $region10: #{tpu_custom_call.1} parent=5 // pred_check_branch
        %123 = sbr.rel (%p120) target = $region12
      $region11: #{tpu_custom_call.1} parent=5 // pred_region
        %s124 = ssub.s32 %s16, 1
        // Predicated region
        $region13: #{tpu_custom_call.1} parent=11 // pred_check
          %p125 = pneg %p63
        $region14: #{tpu_custom_call.1} parent=11 // pred_check_branch
          %127 = sbr.rel (%p125) target = $region16
        $region15: #{tpu_custom_call.1} parent=11 // pred_region
          %s129 = ssub.s32 2048, 2048
          %130 = vsyncadd [#allocation6], %s129
          %s131 = sshll.u32 [#allocation5], 4
          %s132 = int_to_ptr.vmem [resolvable:$true] %s131
          %137 = dma.hbm_to_vmem [thread:$0]  %s1, 2048, %s132, [#allocation6], 128, 128, 8
        $region16: #{tpu_custom_call.1} parent=11 // pred_fallthru
          _
        // Predicated region
        $region17: #{tpu_custom_call.1} parent=11 // pred_check
          %p138 = pneg %p84
        $region18: #{tpu_custom_call.1} parent=11 // pred_check_branch
          %140 = sbr.rel (%p138) target = $region20
        $region19: #{tpu_custom_call.1} parent=11 // pred_region
          %s142 = ssub.s32 128, 128
          %143 = vsyncadd [#allocation6], %s142
          %s145 = sshll.u32 [#allocation7], 4
          %s146 = int_to_ptr.vmem [resolvable:$true] %s145
          %148 = dma.hbm_to_vmem [thread:$0]  %s2, 128, %s146, [#allocation6]
        $region20: #{tpu_custom_call.1} parent=11 // pred_fallthru
          _
      $region12: #{tpu_custom_call.1} parent=5 // pred_fallthru
        _
      %p149 = scmp.lt.s32.totalorder %s16, 2
      // Predicated region
      $region21: #{tpu_custom_call.1} parent=5 // pred_check
        %p150 = pneg %p149
      $region22: #{tpu_custom_call.1} parent=5 // pred_check_branch
        %152 = sbr.rel (%p150) target = $region24
      $region23: #{tpu_custom_call.1} parent=5 // pred_region
        // Predicated region
        $region25: #{tpu_custom_call.1} parent=23 // pred_check
          %p153 = pneg %p36
        $region26: #{tpu_custom_call.1} parent=23 // pred_check_branch
          %155 = sbr.rel (%p153) target = $region28
        $region27: #{tpu_custom_call.1} parent=23 // pred_region
          %s156 = sand.u32 %s26, 1
          %s157 = scalar_lea.sflag [#allocation3], %s156
          %s158 = sand.u32 %s26, 1
          %s159 = smul.addr %s158, 16
          %s160 = scalar_lea.vmem [#allocation2], %s159
          %s162 = ssub.s32 256, 256
          %163 = vsyncadd %s157, %s162
          %s164 = smul.addr %s16, 128
          %s165 = scalar_lea.hbm %s0, %s164
          %s166 = sshll.u32 %s160, 4
          %s167 = int_to_ptr.vmem [resolvable:$true] %s166
          %172 = dma.hbm_to_vmem [thread:$0]  %s165, 256, %s167, %s157, 256, 128, 8
        $region28: #{tpu_custom_call.1} parent=23 // pred_fallthru
          _
      $region24: #{tpu_custom_call.1} parent=5 // pred_fallthru
        _
      %p173 = scmp.le.s32.totalorder 1, %s16
      %p174 = scmp.lt.s32.totalorder %s16, 3
      %p175 = pnand %p173, %p174
      %p176 = pneg %p175
      // Predicated region
      $region29: #{tpu_custom_call.1} parent=5 // pred_check
        _
      $region30: #{tpu_custom_call.1} parent=5 // pred_check_branch
        %178 = sbr.rel (%p175) target = $region32
      $region31: #{tpu_custom_call.1} parent=5 // pred_region
        %s179 = ssub.s32 %s16, 1
        %s180 = sand.u32 %s29, 1
        %s181 = scalar_lea.sflag [#allocation3], %s180
        %s182 = sand.u32 %s29, 1
        %s183 = smul.addr %s182, 16
        %s184 = scalar_lea.vmem [#allocation2], %s183
        // Predicated region
        $region33: #{tpu_custom_call.1} parent=31 // pred_check
          %p185 = pneg %p42
        $region34: #{tpu_custom_call.1} parent=31 // pred_check_branch
          %187 = sbr.rel (%p185) target = $region36
        $region35: #{tpu_custom_call.1} parent=31 // pred_region
          %188 = dma.done %s181, 256
        $region36: #{tpu_custom_call.1} parent=31 // pred_fallthru
          _
        // Predicated region
        $region37: #{tpu_custom_call.1} parent=31 // pred_check
          %p189 = pneg %p63
        $region38: #{tpu_custom_call.1} parent=31 // pred_check_branch
          %191 = sbr.rel (%p189) target = $region40
        $region39: #{tpu_custom_call.1} parent=31 // pred_region
          %192 = dma.done [#allocation6], 2048
        $region40: #{tpu_custom_call.1} parent=31 // pred_fallthru
          _
        // Predicated region
        $region41: #{tpu_custom_call.1} parent=31 // pred_check
          %p193 = pneg %p84
        $region42: #{tpu_custom_call.1} parent=31 // pred_check_branch
          %195 = sbr.rel (%p193) target = $region44
        $region43: #{tpu_custom_call.1} parent=31 // pred_region
          %196 = dma.done [#allocation6], 128
        $region44: #{tpu_custom_call.1} parent=31 // pred_fallthru
          _
        %s197 = sand.u32 %s29, 1
        %s198 = scalar_lea.sflag [#allocation3], %s197
        %s199 = sand.u32 %s29, 1
        %s200 = smul.addr %s199, 16
        %s201 = scalar_lea.vmem [#allocation2], %s200
        %p202 = pneg %p42
        %p203 = pneg %p39
        %p204 = pneg %p63
        %p205 = pneg %p60
        %p206 = pneg %p84
        %p207 = pneg %p81
        %p208 = pneg %p110
        %p209 = pneg %p107
        %s210 = sand.u32 %s97, 1
        %s211 = scalar_lea.sflag [#allocation4], %s210
        %s212 = sand.u32 %s97, 1
        %s213 = smul.addr %s212, 16
        %s214 = scalar_lea.vmem [#allocation8], %s213
        %v215 = vld [vmem:[%s184] sm:$0xff]
        %v216 = vld [vmem:[%s184 + $0x8] sm:$0xff]
        %v217 = vld [vmem:[#allocation7] sm:$0xff]
        %v218 = vmul.f32 %v215, %v215
        %v219 = vmul.f32 %v216, %v216
        %v220 = vadd.f32 %v218, %v219
        %v221 = vrsqrt.pop %v220
        %v222 = vmul.f32 %v220, %v221
        %vm223 = vcmp.eq.f32.partialorder %v220, inf
        %v224 = vsel %vm223, %v220, %v222
        %vm225 = vcmp.eq.f32.partialorder %v220, 0.0
        %v226 = vand.u32 %v220, 2147483648
        %v227 = vsel %vm225, %v226, %v224
        %v228 = vld [vmem:[#allocation5] sm:$0xff]
        %v229 = vld [vmem:[#allocation5 + $0x8] sm:$0xff]
        %v230 = vld [vmem:[#allocation5 + $0x10] sm:$0xff]
        %v231 = vld [vmem:[#allocation5 + $0x18] sm:$0xff]
        %v232 = vld [vmem:[#allocation5 + $0x20] sm:$0xff]
        %v233 = vld [vmem:[#allocation5 + $0x28] sm:$0xff]
        %v234 = vld [vmem:[#allocation5 + $0x30] sm:$0xff]
        %v235 = vld [vmem:[#allocation5 + $0x38] sm:$0xff]
        %v236 = vld [vmem:[#allocation5 + $0x40] sm:$0xff]
        %v237 = vld [vmem:[#allocation5 + $0x48] sm:$0xff]
        %v238 = vld [vmem:[#allocation5 + $0x50] sm:$0xff]
        %v239 = vld [vmem:[#allocation5 + $0x58] sm:$0xff]
        %v240 = vld [vmem:[#allocation5 + $0x60] sm:$0xff]
        %v241 = vld [vmem:[#allocation5 + $0x68] sm:$0xff]
        %v242 = vld [vmem:[#allocation5 + $0x70] sm:$0xff]
        %v243 = vld [vmem:[#allocation5 + $0x78] sm:$0xff]
        %244 = vmatprep.subr.mxu0 0.0
        %245 = vmatpush1.msra.mxu0 %v243
        %246 = vmatprep.subr.mxu0 0.0
        %247 = vmatpush1.msra.mxu0 %v242
        %248 = vmatprep.subr.mxu0 0.0
        %249 = vmatpush1.msra.mxu0 %v241
        %250 = vmatprep.subr.mxu0 0.0
        %251 = vmatpush1.msra.mxu0 %v240
        %252 = vmatprep.subr.mxu0 0.0
        %253 = vmatpush1.msra.mxu0 %v239
        %254 = vmatprep.subr.mxu0 0.0
        %255 = vmatpush1.msra.mxu0 %v238
        %256 = vmatprep.subr.mxu0 0.0
        %257 = vmatpush1.msra.mxu0 %v237
        %258 = vmatprep.subr.mxu0 0.0
        %259 = vmatpush1.msra.mxu0 %v236
        %260 = vmatprep.subr.mxu0 0.0
        %261 = vmatpush1.msra.mxu0 %v235
        %262 = vmatprep.subr.mxu0 0.0
        %263 = vmatpush1.msra.mxu0 %v234
        %264 = vmatprep.subr.mxu0 0.0
        %265 = vmatpush1.msra.mxu0 %v233
        %266 = vmatprep.subr.mxu0 0.0
        %267 = vmatpush1.msra.mxu0 %v232
        %268 = vmatprep.subr.mxu0 0.0
        %269 = vmatpush1.msra.mxu0 %v231
        %270 = vmatprep.subr.mxu0 0.0
        %271 = vmatpush1.msra.mxu0 %v230
        %272 = vmatprep.subr.mxu0 0.0
        %273 = vmatpush1.msra.mxu0 %v229
        %274 = vmatprep.subr.mxu0 0.0
        %275 = vmatpush1.msra.mxu0 %v228
        %276 = vmatprep.subr.mxu0 0.0
        %277 = vmatpush2.msra.mxu0 0.0
        %278 = vmatprep.subr.mxu0 0.0
        %279 = vmatpush2.msra.mxu0 0.0
        %280 = vmatprep.subr.mxu0 0.0
        %281 = vmatpush2.msra.mxu0 0.0
        %282 = vmatprep.subr.mxu0 0.0
        %283 = vmatpush2.msra.mxu0 0.0
        %284 = vmatprep.subr.mxu0 0.0
        %285 = vmatpush2.msra.mxu0 0.0
        %286 = vmatprep.subr.mxu0 0.0
        %287 = vmatpush2.msra.mxu0 0.0
        %288 = vmatprep.subr.mxu0 0.0
        %289 = vmatpush2.msra.mxu0 0.0
        %290 = vmatprep.subr.mxu0 0.0
        %291 = vmatpush2.msra.mxu0 0.0
        %292 = vmatprep.subr.mxu0 0.0
        %293 = vmatpush2.msra.mxu0 0.0
        %294 = vmatprep.subr.mxu0 0.0
        %295 = vmatpush2.msra.mxu0 0.0
        %296 = vmatprep.subr.mxu0 0.0
        %297 = vmatpush2.msra.mxu0 0.0
        %298 = vmatprep.subr.mxu0 0.0
        %299 = vmatpush2.msra.mxu0 0.0
        %300 = vmatprep.subr.mxu0 0.0
        %301 = vmatpush2.msra.mxu0 0.0
        %302 = vmatprep.subr.mxu0 0.0
        %303 = vmatpush2.msra.mxu0 0.0
        %304 = vmatprep.subr.mxu0 0.0
        %305 = vmatpush2.msra.mxu0 0.0
        %306 = vmatprep.subr.mxu0 0.0
        %307 = vmatpush2.msra.mxu0 0.0
        %308 = vmatprep.mubr.f32.mxu0 0.0
        %309 = vmatmul.mubr.f32.gmra.mxu0 %v215
        %v310 = vpop.f32.mrf.mxu0
        %v311 = vadd.f32 0.0, %v310
        %v312 = vpop.f32.mrf.mxu0
        %313 = vmatprep.mubr.f32.mxu0 0.0
        %314 = vmatmul.mubr.f32.gmra.mxu0 %v216
        %v315 = vpop.f32.mrf.mxu0
        %v316 = vadd.f32 0.0, %v315
        %v317 = vpop.f32.mrf.mxu0
        %318 = vmatprep.mubr.f32.mxu0 0.0
        %319 = vmatmul.mubr.f32.gmra.mxu0 %v227
        %v320 = vpop.f32.mrf.mxu0
        %v321 = vadd.f32 0.0, %v320
        %v322 = vpop.f32.mrf.mxu0
        %323 = vdwg.mxu0
        %v324 = vlaneseq
        %v325 = vshrl.u32 %v324, 7
        %v326 = vsub.s32 0, %v325
        %v327 = vrot.slane %v217, %v326
        %v328 = vadd.f32 %v321, %v327
        %v329 = vmul.f32 %v311, %v311
        %v330 = vmul.f32 %v316, %v316
        %v331 = vadd.f32 %v329, %v330
        %v332 = vrsqrt.pop %v331
        %v333 = vmul.f32 %v331, %v332
        %vm334 = vcmp.eq.f32.partialorder %v331, inf
        %v335 = vsel %vm334, %v331, %v333
        %vm336 = vcmp.eq.f32.partialorder %v331, 0.0
        %v337 = vand.u32 %v331, 2147483648
        %v338 = vsel %vm336, %v337, %v335
        %v339 = vadd.f32 %v338, %v327
        %v340 = vmul.f32 %v339, 0.5
        %v341 = vmul.f32 %v328, 0.5
        %v342 = vadd.f32 %v340, %v341
        %v343 = vand.u32 2147483647, %v316
        %vm344 = vcmp.lt.f32.partialorder %v343, 1e-08
        %v345 = vsel %vm344, 1e-08, %v316
        %v346 = vmul.f32 %v345, %v345
        %v347 = vadd.f32 %v329, %v346
        %v348 = vrsqrt.pop %v347
        %349 = vadd.xlane.f32.xlu0 %v342
        %v350 = vpop.xlane.xlu0 %349
        %v351 = vmul.f32 %v350, 0.03125
        %v352 = vsub.f32 %v342, %v351
        %v353 = vlaneseq
        %v354 = vshrl.u32 %v353, 7
        %v355 = vsub.s32 5, %v354
        %v356 = vrot.slane %v217, %v355
        %v357 = vmul.f32 %v352, %v356
        %v358 = vmul.f32 %v357, %v357
        %359 = vadd.xlane.f32.xlu0 %v358
        %v360 = vpop.xlane.xlu0 %359
        %v361 = vmul.f32 %v360, 0.03125
        %v362 = vadd.f32 %v361, 1e-05
        %v363 = vrsqrt.pop %v362
        %v364 = vmul.f32 %v357, %v363
        %v365 = vlaneseq
        %v366 = vshrl.u32 %v365, 7
        %v367 = vsub.s32 3, %v366
        %v368 = vrot.slane %v217, %v367
        %v369 = vmul.f32 %v364, %v368
        %v370 = vlaneseq
        %v371 = vshrl.u32 %v370, 7
        %v372 = vsub.s32 4, %v371
        %v373 = vrot.slane %v217, %v372
        %v374 = vadd.f32 %v369, %v373
        %v375 = vmax.f32 %v374, 0.0
        %v376 = vlaneseq
        %v377 = vshrl.u32 %v376, 7
        %v378 = vsub.s32 1, %v377
        %v379 = vrot.slane %v217, %v378
        %v380 = vmul.f32 %v311, %v379
        %v381 = vlaneseq
        %v382 = vshrl.u32 %v381, 7
        %v383 = vsub.s32 2, %v382
        %v384 = vrot.slane %v217, %v383
        %v385 = vmul.f32 %v345, %v384
        %v386 = vsub.f32 %v380, %v385
        %v387 = vmul.f32 %v386, %v348
        %v388 = vmul.f32 %v345, %v379
        %v389 = vmul.f32 %v311, %v384
        %v390 = vadd.f32 %v388, %v389
        %v391 = vmul.f32 %v390, %v348
        %v392 = vmul.f32 %v375, %v387
        %v393 = vmul.f32 %v375, %v391
        %394 = vst [vmem:[%s214] sm:$0xff] %v392
        %395 = vst [vmem:[%s214 + $0x8] sm:$0xff] %v393
        %s396 = sand.u32 %s97, 1
        %s397 = scalar_lea.sflag [#allocation4], %s396
        %s398 = sand.u32 %s97, 1
        %s399 = smul.addr %s398, 16
        %s400 = scalar_lea.vmem [#allocation8], %s399
        // Predicated region
        $region45: #{tpu_custom_call.1} parent=31 // pred_check
          %p401 = pneg %p107
        $region46: #{tpu_custom_call.1} parent=31 // pred_check_branch
          %403 = sbr.rel (%p401) target = $region48
        $region47: #{tpu_custom_call.1} parent=31 // pred_region
          %s405 = ssub.s32 256, 256
          %406 = vsyncadd %s397, %s405
          %s407 = smul.addr %s21, 128
          %s408 = scalar_lea.hbm %s3, %s407
          %s409 = sshll.u32 %s400, 4
          %s410 = int_to_ptr.vmem [resolvable:$true] %s409
          %415 = dma.vmem_to_hbm [thread:$0]  %s410, 256, %s408, %s397, 128, 256, 8
        $region48: #{tpu_custom_call.1} parent=31 // pred_fallthru
          _
      $region32: #{tpu_custom_call.1} parent=5 // pred_fallthru
        _
      %p416 = scmp.le.s32.totalorder 2, %s16
      // Predicated region
      $region49: #{tpu_custom_call.1} parent=5 // pred_check
        %p417 = pneg %p416
      $region50: #{tpu_custom_call.1} parent=5 // pred_check_branch
        %419 = sbr.rel (%p417) target = $region52
      $region51: #{tpu_custom_call.1} parent=5 // pred_region
        %s420 = ssub.s32 %s16, 2
        // Predicated region
        $region53: #{tpu_custom_call.1} parent=51 // pred_check
          %p421 = pneg %p113
        $region54: #{tpu_custom_call.1} parent=51 // pred_check_branch
          %423 = sbr.rel (%p421) target = $region56
        $region55: #{tpu_custom_call.1} parent=51 // pred_region
          %s424 = sand.u32 %s98, 1
          %s425 = scalar_lea.sflag [#allocation4], %s424
          %s426 = sand.u32 %s98, 1
          %s427 = smul.addr %s426, 16
          %s428 = scalar_lea.vmem [#allocation8], %s427
          %429 = dma.done %s425, 256
        $region56: #{tpu_custom_call.1} parent=51 // pred_fallthru
          _
      $region52: #{tpu_custom_call.1} parent=5 // pred_fallthru
        _
    $region6: #{tpu_custom_call.1} parent=1 // loop_footer
      %s20 = sadd.s32 1, %s16
    $region7: #{tpu_custom_call.1} parent=1 // loop_footer_branch
      %15 = sbr.rel target = $region3
    $region8: #{tpu_custom_call.1} parent=1 // loop_exit
      _
    %430 = vsyncpa [#allocation3], 1
    %s431 = scalar_lea.sflag [#allocation3], 1
    %432 = vsyncpa %s431, 1
    %433 = vsyncpa [#allocation6], 1
    %434 = vsyncpa [#allocation4], 1
    %s435 = scalar_lea.sflag [#allocation4], 1
    %436 = vsyncpa %s435, 1

</llo_original>
